<compile_context>
chip_gen: v7x
topology: tpu7x:2x2x1
jax: 0.10.0
libtpu: 0.0.40
codegen_flags: <defaults>
</compile_context>

<pallas_src>
import numpy as np
import jax
import jax.numpy as jnp
from jax import lax
from jax.experimental import pallas as pl
from jax.experimental.pallas import tpu as pltpu


def _sobel_kernel(x_ref, top_ref, bot_ref, o_ref):
    # x_ref  : VMEM (1, 1, TH, W) input row-tile (unpadded)
    # top_ref: VMEM (1, 1, 1, W)  row just above the tile (zeros at image top)
    # bot_ref: VMEM (1, 1, 1, W)  row just below the tile (zeros at image bottom)
    # o_ref  : VMEM (1, 2, TH, W) output tile (Gx, Gy)
    TH = x_ref.shape[2]
    W = x_ref.shape[3]

    xc = x_ref[0, 0]          # (TH, W)
    top = top_ref[0, 0]       # (1, W)
    bot = bot_ref[0, 0]       # (1, W)

    # Vertically extended tile: halo rows come from neighbor tiles / zeros.
    xv = jnp.concatenate([top, xc, bot], axis=0)   # (TH + 2, W)
    up = xv[0:TH]             # x[i - 1]
    dn = xv[2:TH + 2]         # x[i + 1]

    # Separable Sobel with baked constants:
    #   Gx = [-1, 0, 1]_x applied to ([1, 2, 1]_y * x)
    #   Gy = [ 1, 2, 1]_x applied to ([-1, 0, 1]_y * x)
    t1 = up + (xc + xc) + dn       # vertical [1, 2, 1]
    t2 = dn - up                   # vertical [-1, 0, 1]

    # Horizontal halo as in-kernel zero columns only; HBM-facing I/O stays
    # lane-dense at width W.
    zcol = jnp.zeros((TH, 1), jnp.float32)
    t1e = jnp.concatenate([zcol, t1, zcol], axis=1)   # (TH, W + 2)
    t2e = jnp.concatenate([zcol, t2, zcol], axis=1)   # (TH, W + 2)

    gx = t1e[:, 2:W + 2] - t1e[:, 0:W]                # horizontal [-1, 0, 1]
    gy = t2e[:, 0:W] + (t2 + t2) + t2e[:, 2:W + 2]    # horizontal [ 1, 2, 1]

    o_ref[0, 0, :, :] = gx.astype(o_ref.dtype)
    o_ref[0, 1, :, :] = gy.astype(o_ref.dtype)


def _pick_tile_h(H, W, itemsize=4, target_bytes=2 << 20):
    """Largest row-tile TH that divides H, is a multiple of 8 and keeps the
    per-step input tile around `target_bytes`, so the double-buffered
    (input + 2x output) footprint stays well inside scoped VMEM on v7x."""
    if H % 8 != 0:
        return H  # block dims must be %8 or equal the full extent
    budget_rows = max(8, target_bytes // (itemsize * max(W, 1)))
    if H <= budget_rows:
        return H
    th = 8
    for cand in range(8, H, 8):
        if H % cand == 0 and cand <= budget_rows:
            th = cand
    return th


def sobel_forward(x):
    """x: (N, 1, H, W) float32 -> (N, 2, H, W) float32 (Gx, Gy)."""
    N, C, H, W = x.shape
    assert C == 1, "Sobel module expects a single input channel"
    x = x.astype(jnp.float32)

    TH = _pick_tile_h(H, W)
    num_t = H // TH

    # Per-tile 1-row halos (tiny: 2 rows per tile vs TH rows of payload).
    zrow = jnp.zeros((N, 1, 1, W), jnp.float32)
    if num_t > 1:
        top_rows = x[:, :, TH - 1:H - 1:TH, :]   # row above tiles 1..num_t-1
        bot_rows = x[:, :, TH:H:TH, :]           # row below tiles 0..num_t-2
        top = jnp.concatenate([zrow, top_rows], axis=2)
        bot = jnp.concatenate([bot_rows, zrow], axis=2)
    else:
        top = zrow
        bot = zrow
    # (N, 1, num_t, W) -> (N, num_t, 1, W): keep the halo row as the full
    # (sublane, lane) = (1, W) trailing block so its BlockSpec is legal.
    top = top.reshape(N, num_t, 1, W)
    bot = bot.reshape(N, num_t, 1, W)

    out = pl.pallas_call(
        _sobel_kernel,
        out_shape=jax.ShapeDtypeStruct((N, 2, H, W), jnp.float32),
        grid=(N, num_t),
        in_specs=[
            pl.BlockSpec((1, 1, TH, W), lambda n, t: (n, 0, t, 0)),
            pl.BlockSpec((1, 1, 1, W), lambda n, t: (n, t, 0, 0)),
            pl.BlockSpec((1, 1, 1, W), lambda n, t: (n, t, 0, 0)),
        ],
        out_specs=pl.BlockSpec((1, 2, TH, W), lambda n, t: (n, 0, t, 0)),
        compiler_params=pltpu.CompilerParams(
            dimension_semantics=("parallel", "parallel")),
    )(x, top, bot)

    # PyTorch: out.contiguous().view(-1, 2, H, W) -> identical shape here.
    return out.reshape(-1, 2, H, W)


def _reference(x):
    edge_kx = np.array([[-1, 0, 1], [-2, 0, 2], [-1, 0, 1]], dtype=np.float32)
    edge_ky = np.array([[-1, -2, -1], [0, 0, 0], [1, 2, 1]], dtype=np.float32)
    k = jnp.asarray(np.stack((edge_kx, edge_ky))[:, None, :, :])  # (2,1,3,3) OIHW
    return lax.conv_general_dilated(
        x, k, window_strides=(1, 1), padding=((1, 1), (1, 1)),
        dimension_numbers=("NCHW", "OIHW", "NCHW"))


if __name__ == "__main__":
    key = jax.random.PRNGKey(0)
    x = jax.random.normal(key, (2, 1, 16, 16), dtype=jnp.float32)

    out = jax.block_until_ready(sobel_forward(x))
    ref = jax.block_until_ready(_reference(x))

    assert out.shape == (2, 2, 16, 16)
    np.testing.assert_allclose(np.asarray(out), np.asarray(ref),
                               rtol=1e-5, atol=1e-5)
    print("KERNEL_OK")
</pallas_src>

<mosaic_0001>
module attributes {stable_mosaic.version = 11 : i64} {
  func.func @_sobel_kernel(%arg0: i32, %arg1: i32, %arg2: memref<1x1x16x16xf32, #tpu.memory_space<vmem>>, %arg3: memref<1x1x1x16xf32, #tpu.memory_space<vmem>>, %arg4: memref<1x1x1x16xf32, #tpu.memory_space<vmem>>, %arg5: memref<1x2x16x16xf32, #tpu.memory_space<vmem>>) attributes {dimension_semantics = [#tpu.dimension_semantics<parallel>, #tpu.dimension_semantics<parallel>], iteration_bounds = array<i64: 2, 1>, scalar_prefetch = 0 : i64, scratch_operands = 0 : i64, tpu.core_type = #tpu.core_type<tc>, window_params = [{transform_indices = @transform_0, window_bounds = array<i64: 1, 1, 16, 16>}, {transform_indices = @transform_1, window_bounds = array<i64: 1, 1, 1, 16>}, {transform_indices = @transform_2, window_bounds = array<i64: 1, 1, 1, 16>}, {transform_indices = @transform_3, window_bounds = array<i64: 1, 2, 16, 16>}]} {
    %c0 = arith.constant 0 : index
    %c0_0 = arith.constant 0 : index
    %c0_1 = arith.constant 0 : index
    %c0_2 = arith.constant 0 : index
    %0 = vector.load %arg2[%c0, %c0_0, %c0_1, %c0_2] : memref<1x1x16x16xf32, #tpu.memory_space<vmem>>, vector<1x1x16x16xf32>
    %1 = vector.shape_cast %0 : vector<1x1x16x16xf32> to vector<16x16xf32>
    %c0_3 = arith.constant 0 : index
    %c0_4 = arith.constant 0 : index
    %c0_5 = arith.constant 0 : index
    %c0_6 = arith.constant 0 : index
    %2 = vector.load %arg3[%c0_3, %c0_4, %c0_5, %c0_6] : memref<1x1x1x16xf32, #tpu.memory_space<vmem>>, vector<1x1x1x16xf32>
    %3 = vector.shape_cast %2 : vector<1x1x1x16xf32> to vector<1x16xf32>
    %c0_7 = arith.constant 0 : index
    %c0_8 = arith.constant 0 : index
    %c0_9 = arith.constant 0 : index
    %c0_10 = arith.constant 0 : index
    %4 = vector.load %arg4[%c0_7, %c0_8, %c0_9, %c0_10] : memref<1x1x1x16xf32, #tpu.memory_space<vmem>>, vector<1x1x1x16xf32>
    %5 = vector.shape_cast %4 : vector<1x1x1x16xf32> to vector<1x16xf32>
    %6 = tpu.concatenate %3, %1, %5 in 0 : vector<1x16xf32>, vector<16x16xf32>, vector<1x16xf32> -> vector<18x16xf32>
    %7 = vector.extract_strided_slice %6 {offsets = [0, 0], sizes = [16, 16], strides = [1, 1]} : vector<18x16xf32> to vector<16x16xf32>
    %8 = vector.extract_strided_slice %6 {offsets = [2, 0], sizes = [16, 16], strides = [1, 1]} : vector<18x16xf32> to vector<16x16xf32>
    %9 = arith.addf %1, %1 : vector<16x16xf32>
    %10 = arith.addf %7, %9 : vector<16x16xf32>
    %11 = arith.addf %10, %8 : vector<16x16xf32>
    %12 = arith.subf %8, %7 : vector<16x16xf32>
    %cst = arith.constant 0.000000e+00 : f32
    %13 = vector.broadcast %cst : f32 to vector<16x1xf32>
    %14 = tpu.concatenate %13, %11, %13 in 1 : vector<16x1xf32>, vector<16x16xf32>, vector<16x1xf32> -> vector<16x18xf32>
    %15 = tpu.concatenate %13, %12, %13 in 1 : vector<16x1xf32>, vector<16x16xf32>, vector<16x1xf32> -> vector<16x18xf32>
    %16 = vector.extract_strided_slice %14 {offsets = [0, 2], sizes = [16, 16], strides = [1, 1]} : vector<16x18xf32> to vector<16x16xf32>
    %17 = vector.extract_strided_slice %14 {offsets = [0, 0], sizes = [16, 16], strides = [1, 1]} : vector<16x18xf32> to vector<16x16xf32>
    %18 = arith.subf %16, %17 : vector<16x16xf32>
    %19 = vector.extract_strided_slice %15 {offsets = [0, 0], sizes = [16, 16], strides = [1, 1]} : vector<16x18xf32> to vector<16x16xf32>
    %20 = arith.addf %12, %12 : vector<16x16xf32>
    %21 = arith.addf %19, %20 : vector<16x16xf32>
    %22 = vector.extract_strided_slice %15 {offsets = [0, 2], sizes = [16, 16], strides = [1, 1]} : vector<16x18xf32> to vector<16x16xf32>
    %23 = arith.addf %21, %22 : vector<16x16xf32>
    %c0_11 = arith.constant 0 : index
    %c0_12 = arith.constant 0 : index
    %c0_13 = arith.constant 0 : index
    %c0_14 = arith.constant 0 : index
    %24 = vector.load %arg5[%c0_11, %c0_12, %c0_13, %c0_14] : memref<1x2x16x16xf32, #tpu.memory_space<vmem>>, vector<1x1x16x16xf32>
    %25 = vector.shape_cast %24 : vector<1x1x16x16xf32> to vector<16x16xf32>
    %26 = vector.shape_cast %18 : vector<16x16xf32> to vector<1x1x16x16xf32>
    tpu.vector_store %arg5[%c0_11, %c0_12, %c0_13, %c0_14], %26 {strides = array<i32>} : memref<1x2x16x16xf32, #tpu.memory_space<vmem>>, vector<1x1x16x16xf32>,
    %c0_15 = arith.constant 0 : index
    %c1 = arith.constant 1 : index
    %c0_16 = arith.constant 0 : index
    %c0_17 = arith.constant 0 : index
    %27 = vector.load %arg5[%c0_15, %c1, %c0_16, %c0_17] : memref<1x2x16x16xf32, #tpu.memory_space<vmem>>, vector<1x1x16x16xf32>
    %28 = vector.shape_cast %27 : vector<1x1x16x16xf32> to vector<16x16xf32>
    %29 = vector.shape_cast %23 : vector<16x16xf32> to vector<1x1x16x16xf32>
    tpu.vector_store %arg5[%c0_15, %c1, %c0_16, %c0_17], %29 {strides = array<i32>} : memref<1x2x16x16xf32, #tpu.memory_space<vmem>>, vector<1x1x16x16xf32>,
    return
  }
  func.func @transform_0(%arg0: i32, %arg1: i32) -> (i32, i32, i32, i32) {
    %c0_i32 = arith.constant 0 : i32
    %c0_i32_0 = arith.constant 0 : i32
    %c0_i32_1 = arith.constant 0 : i32
    return %arg0, %c0_i32, %arg1, %c0_i32_0 : i32, i32, i32, i32
  }
  func.func @transform_1(%arg0: i32, %arg1: i32) -> (i32, i32, i32, i32) {
    %c0_i32 = arith.constant 0 : i32
    %c0_i32_0 = arith.constant 0 : i32
    %c0_i32_1 = arith.constant 0 : i32
    return %arg0, %arg1, %c0_i32, %c0_i32_0 : i32, i32, i32, i32
  }
  func.func @transform_2(%arg0: i32, %arg1: i32) -> (i32, i32, i32, i32) {
    %c0_i32 = arith.constant 0 : i32
    %c0_i32_0 = arith.constant 0 : i32
    %c0_i32_1 = arith.constant 0 : i32
    return %arg0, %arg1, %c0_i32, %c0_i32_0 : i32, i32, i32, i32
  }
  func.func @transform_3(%arg0: i32, %arg1: i32) -> (i32, i32, i32, i32) {
    %c0_i32 = arith.constant 0 : i32
    %c0_i32_0 = arith.constant 0 : i32
    %c0_i32_1 = arith.constant 0 : i32
    return %arg0, %c0_i32, %arg1, %c0_i32_0 : i32, i32, i32, i32
  }
}

</mosaic_0001>

<llo_original>
// kernel: tpu_custom_call.1
$region0: #{tpu_custom_call.1}
  #allocation0 [shape = 'u32[]', space=smem, size = 0x4, offset = 0x4, fixed_abs, tag = 'smem constant byte address 0x4 - core index']
  #allocation1 [shape = 'u32[144,128]{1,0:T(1,128)}', space=vmem, size = 0x12000, scoped, tag = 'internal scratch']
  %s0 = inlined_call_operand.hbm [shape: f32[2,1,16,16], index: 0, kind: input, shape index: {}]
  %s1 = inlined_call_operand.vmem [shape: f32[2,1,1,16], index: 1, kind: input, shape index: {}]
  %s2 = inlined_call_operand.vmem [shape: f32[2,1,1,16], index: 2, kind: input, shape index: {}]
  %s3 = inlined_call_operand.hbm [shape: f32[2,2,16,16], index: 3, kind: output, shape index: {}]
  %s4 = sld [smem:[#allocation0]]
  $region49: #{tpu_custom_call.1} parent=0
    _
  %s6 = ssub.s32 1, %s4
  %s7 = scalar_select 0, %s6, %s4
  $region1: #{tpu_custom_call.1} parent=0
    #allocation2 [shape = 'u8[16384]{0}', space=vmem, size = 0x4000, scoped, tag = 'input window, operand 0']
    #allocation3 [shape = 's32[2]{0}', space=sflag, size = 0x8, scoped, tag = 'scoped memory for tpu_custom_call.1']
    #allocation4 [shape = 's32[2]{0}', space=sflag, size = 0x8, scoped, tag = 'scoped memory for tpu_custom_call.1']
    #allocation5 [shape = 'u8[32768]{0}', space=vmem, size = 0x8000, scoped, tag = 'output window, operand 0']
    %8 = vsyncpa [#allocation3], 0
    %s9 = scalar_lea.sflag [#allocation3], 1
    %10 = vsyncpa %s9, 0
    %11 = vsyncpa [#allocation4], 0
    %s12 = scalar_lea.sflag [#allocation4], 1
    %13 = vsyncpa %s12, 0
    loop: start=0, step=1, limit=4
    $region2: #{tpu_custom_call.1} parent=1 // loop_pre_header
      _
    $region3: #{tpu_custom_call.1} parent=1 // loop_header
      %s15 = sphi 0, %s19
      %p16 = scmp.ge.s32.totalorder %s15, 4
      %s22 = sphi 0, %s34
      %s23 = sphi 0, %s30
      %s24 = sphi 0, %s22
      %s25 = sphi 0, %s23
      %s26 = sphi 0, %s24
      %s27 = sphi 0, %s25
      %s39 = sphi 0, %s41
      %s42 = sphi 0, %s39
      %s43 = sphi 0, %s42
      %s59 = sphi 0, %s43
      %s67 = sphi 0, %s69
      %s70 = sphi 0, %s67
      %s71 = sphi 0, %s70
      %s87 = sphi 0, %s71
      %s95 = sphi 0, %s97
      %s98 = sphi 0, %s95
      %s99 = sphi 0, %s98
      %s115 = sphi 0, %s99
      %s123 = sphi 0, %s125
      %s126 = sphi 0, %s123
      %s127 = sphi 0, %s126
      %s143 = sphi 0, %s127
    $region4: #{tpu_custom_call.1} parent=1 // loop_header_branch
      %18 = sbr.rel (%p16) target = $region8
    $region5: #{tpu_custom_call.1} parent=1 // loop_body
      %s20 = ssub.s32 %s15, 1
      %s21 = ssub.s32 %s15, 2
      %s28 = sadd.s32 1, %s23
      %p29 = scmp.ge.s32.totalorder %s28, 1
      %s30 = scalar_select %p29, 0, %s28
      %s31 = sadd.s32 1, %s22
      %s32 = scalar_select %p29, %s31, %s22
      %p33 = scmp.ge.s32.totalorder %s32, 2
      %s34 = scalar_select %p33, 0, %s32
      %s35 = ssub.s32 %s22, %s34
      %s36 = ssub.s32 %s23, %s30
      %s37 = sor.u32 %s35, %s36
      %p38 = scmp.eq.s32.totalorder %s37, 0
      %s40 = sadd.s32 %s39, 1
      %s41 = scalar_select %p38, %s39, %s40
      %p44 = pneg %p38
      %p45 = scmp.eq.s32.totalorder %s15, 1
      %p46 = por %p44, %p45
      %p47 = scmp.ne.s32.totalorder %s39, %s42
      %p48 = scmp.eq.s32.totalorder %s15, 0
      %p49 = por %p47, %p48
      %p50 = scmp.ne.s32.totalorder %s39, %s42
      %p51 = scmp.eq.s32.totalorder %s20, 1
      %p52 = por %p50, %p51
      %p53 = scmp.ne.s32.totalorder %s42, %s43
      %p54 = scmp.eq.s32.totalorder %s20, 0
      %p55 = por %p53, %p54
      %p56 = scmp.ne.s32.totalorder %s42, %s43
      %p57 = scmp.eq.s32.totalorder %s21, 1
      %p58 = por %p56, %p57
      %p60 = scmp.ne.s32.totalorder %s43, %s59
      %p61 = scmp.eq.s32.totalorder %s21, 0
      %p62 = por %p60, %p61
      %s63 = ssub.s32 %s22, %s34
      %s64 = ssub.s32 %s23, %s30
      %s65 = sor.u32 %s63, %s64
      %p66 = scmp.eq.s32.totalorder %s65, 0
      %s68 = sadd.s32 %s67, 1
      %s69 = scalar_select %p66, %s67, %s68
      %p72 = pneg %p66
      %p73 = scmp.eq.s32.totalorder %s15, 1
      %p74 = por %p72, %p73
      %p75 = scmp.ne.s32.totalorder %s67, %s70
      %p76 = scmp.eq.s32.totalorder %s15, 0
      %p77 = por %p75, %p76
      %p78 = scmp.ne.s32.totalorder %s67, %s70
      %p79 = scmp.eq.s32.totalorder %s20, 1
      %p80 = por %p78, %p79
      %p81 = scmp.ne.s32.totalorder %s70, %s71
      %p82 = scmp.eq.s32.totalorder %s20, 0
      %p83 = por %p81, %p82
      %p84 = scmp.ne.s32.totalorder %s70, %s71
      %p85 = scmp.eq.s32.totalorder %s21, 1
      %p86 = por %p84, %p85
      %p88 = scmp.ne.s32.totalorder %s71, %s87
      %p89 = scmp.eq.s32.totalorder %s21, 0
      %p90 = por %p88, %p89
      %s91 = ssub.s32 %s22, %s34
      %s92 = ssub.s32 %s23, %s30
      %s93 = sor.u32 %s91, %s92
      %p94 = scmp.eq.s32.totalorder %s93, 0
      %s96 = sadd.s32 %s95, 1
      %s97 = scalar_select %p94, %s95, %s96
      %p100 = pneg %p94
      %p101 = scmp.eq.s32.totalorder %s15, 1
      %p102 = por %p100, %p101
      %p103 = scmp.ne.s32.totalorder %s95, %s98
      %p104 = scmp.eq.s32.totalorder %s15, 0
      %p105 = por %p103, %p104
      %p106 = scmp.ne.s32.totalorder %s95, %s98
      %p107 = scmp.eq.s32.totalorder %s20, 1
      %p108 = por %p106, %p107
      %p109 = scmp.ne.s32.totalorder %s98, %s99
      %p110 = scmp.eq.s32.totalorder %s20, 0
      %p111 = por %p109, %p110
      %p112 = scmp.ne.s32.totalorder %s98, %s99
      %p113 = scmp.eq.s32.totalorder %s21, 1
      %p114 = por %p112, %p113
      %p116 = scmp.ne.s32.totalorder %s99, %s115
      %p117 = scmp.eq.s32.totalorder %s21, 0
      %p118 = por %p116, %p117
      %s119 = ssub.s32 %s22, %s34
      %s120 = ssub.s32 %s23, %s30
      %s121 = sor.u32 %s119, %s120
      %p122 = scmp.eq.s32.totalorder %s121, 0
      %s124 = sadd.s32 %s123, 1
      %s125 = scalar_select %p122, %s123, %s124
      %p128 = pneg %p122
      %p129 = scmp.eq.s32.totalorder %s15, 1
      %p130 = por %p128, %p129
      %p131 = scmp.ne.s32.totalorder %s123, %s126
      %p132 = scmp.eq.s32.totalorder %s15, 0
      %p133 = por %p131, %p132
      %p134 = scmp.ne.s32.totalorder %s123, %s126
      %p135 = scmp.eq.s32.totalorder %s20, 1
      %p136 = por %p134, %p135
      %p137 = scmp.ne.s32.totalorder %s126, %s127
      %p138 = scmp.eq.s32.totalorder %s20, 0
      %p139 = por %p137, %p138
      %p140 = scmp.ne.s32.totalorder %s126, %s127
      %p141 = scmp.eq.s32.totalorder %s21, 1
      %p142 = por %p140, %p141
      %p144 = scmp.ne.s32.totalorder %s127, %s143
      %p145 = scmp.eq.s32.totalorder %s21, 0
      %p146 = por %p144, %p145
      %p147 = scmp.le.s32.totalorder 1, %s15
      %p148 = scmp.lt.s32.totalorder %s15, 3
      %p149 = pnand %p147, %p148
      %p150 = pneg %p149
      // Predicated region
      $region9: #{tpu_custom_call.1} parent=5 // pred_check
        _
      $region10: #{tpu_custom_call.1} parent=5 // pred_check_branch
        %152 = sbr.rel (%p149) target = $region12
      $region11: #{tpu_custom_call.1} parent=5 // pred_region
        %s153 = ssub.s32 %s15, 1
      $region12: #{tpu_custom_call.1} parent=5 // pred_fallthru
        _
      %p154 = scmp.lt.s32.totalorder %s15, 2
      // Predicated region
      $region13: #{tpu_custom_call.1} parent=5 // pred_check
        %p155 = pneg %p154
      $region14: #{tpu_custom_call.1} parent=5 // pred_check_branch
        %157 = sbr.rel (%p155) target = $region16
      $region15: #{tpu_custom_call.1} parent=5 // pred_region
        // Predicated region
        $region17: #{tpu_custom_call.1} parent=15 // pred_check
          %p158 = pneg %p49
        $region18: #{tpu_custom_call.1} parent=15 // pred_check_branch
          %160 = sbr.rel (%p158) target = $region20
        $region19: #{tpu_custom_call.1} parent=15 // pred_region
          %s161 = sand.u32 %s39, 1
          %s162 = scalar_lea.sflag [#allocation3], %s161
          %s163 = sand.u32 %s39, 1
          %s164 = smul.addr %s163, 16
          %s165 = scalar_lea.vmem [#allocation2], %s164
          %s166 = smul.u32 2, %s23
          %s168 = ssub.s32 256, 256
          %169 = vsyncadd %s162, %s168
          %s170 = smul.addr %s22, 2
          %s171 = sadd.s32 %s166, %s170
          %s172 = smul.addr %s171, 128
          %s173 = scalar_lea.hbm %s0, %s172
          %s174 = sshll.u32 %s165, 4
          %s175 = int_to_ptr.vmem [resolvable:$true] %s174
          %180 = dma.hbm_to_vmem [thread:$0]  %s173, 256, %s175, %s162, 128, 128, 8
        $region20: #{tpu_custom_call.1} parent=15 // pred_fallthru
          _
        // Predicated region
        $region21: #{tpu_custom_call.1} parent=15 // pred_check
          %p181 = pneg %p77
        $region22: #{tpu_custom_call.1} parent=15 // pred_check_branch
          %183 = sbr.rel (%p181) target = $region24
        $region23: #{tpu_custom_call.1} parent=15 // pred_region
          %p184 = scmp.lt.s32.totalorder %s22, 1
          %s185 = scalar_select %p184, %s22, 1
          %p186 = scmp.lt.s32.totalorder %s23, 0
          %s187 = scalar_select %p186, %s23, 0
          %s188 = sadd.s32 %s187, %s185
          %s189 = scalar_lea.vmem %s1, %s188
        $region24: #{tpu_custom_call.1} parent=15 // pred_fallthru
          _
        // Predicated region
        $region25: #{tpu_custom_call.1} parent=15 // pred_check
          %p190 = pneg %p105
        $region26: #{tpu_custom_call.1} parent=15 // pred_check_branch
          %192 = sbr.rel (%p190) target = $region28
        $region27: #{tpu_custom_call.1} parent=15 // pred_region
          %p193 = scmp.lt.s32.totalorder %s22, 1
          %s194 = scalar_select %p193, %s22, 1
          %p195 = scmp.lt.s32.totalorder %s23, 0
          %s196 = scalar_select %p195, %s23, 0
          %s197 = sadd.s32 %s196, %s194
          %s198 = scalar_lea.vmem %s2, %s197
        $region28: #{tpu_custom_call.1} parent=15 // pred_fallthru
          _
      $region16: #{tpu_custom_call.1} parent=5 // pred_fallthru
        _
      %p199 = scmp.le.s32.totalorder 1, %s15
      %p200 = scmp.lt.s32.totalorder %s15, 3
      %p201 = pnand %p199, %p200
      %p202 = pneg %p201
      // Predicated region
      $region29: #{tpu_custom_call.1} parent=5 // pred_check
        _
      $region30: #{tpu_custom_call.1} parent=5 // pred_check_branch
        %204 = sbr.rel (%p201) target = $region32
      $region31: #{tpu_custom_call.1} parent=5 // pred_region
        %s205 = ssub.s32 %s15, 1
        %s206 = sand.u32 %s42, 1
        %s207 = scalar_lea.sflag [#allocation3], %s206
        %s208 = sand.u32 %s42, 1
        %s209 = smul.addr %s208, 16
        %s210 = scalar_lea.vmem [#allocation2], %s209
        // Predicated region
        $region33: #{tpu_custom_call.1} parent=31 // pred_check
          %p211 = pneg %p55
        $region34: #{tpu_custom_call.1} parent=31 // pred_check_branch
          %213 = sbr.rel (%p211) target = $region36
        $region35: #{tpu_custom_call.1} parent=31 // pred_region
          %214 = dma.done %s207, 256
        $region36: #{tpu_custom_call.1} parent=31 // pred_fallthru
          _
        %s215 = sand.u32 %s42, 1
        %s216 = scalar_lea.sflag [#allocation3], %s215
        %s217 = sand.u32 %s42, 1
        %s218 = smul.addr %s217, 16
        %s219 = scalar_lea.vmem [#allocation2], %s218
        %p220 = pneg %p55
        %p221 = pneg %p52
        %p222 = scmp.lt.s32.totalorder %s24, 1
        %s223 = scalar_select %p222, %s24, 1
        %p224 = scmp.lt.s32.totalorder %s25, 0
        %s225 = scalar_select %p224, %s25, 0
        %s226 = sadd.s32 %s225, %s223
        %s227 = scalar_lea.vmem %s1, %s226
        %p228 = pneg %p83
        %p229 = pneg %p80
        %p230 = scmp.lt.s32.totalorder %s24, 1
        %s231 = scalar_select %p230, %s24, 1
        %p232 = scmp.lt.s32.totalorder %s25, 0
        %s233 = scalar_select %p232, %s25, 0
        %s234 = sadd.s32 %s233, %s231
        %s235 = scalar_lea.vmem %s2, %s234
        %p236 = pneg %p111
        %p237 = pneg %p108
        %p238 = pneg %p139
        %p239 = pneg %p136
        %s240 = sand.u32 %s126, 1
        %s241 = scalar_lea.sflag [#allocation4], %s240
        %s242 = sand.u32 %s126, 1
        %s243 = smul.addr %s242, 32
        %s244 = scalar_lea.vmem [#allocation5], %s243
        %s245 = smul.u32 2, %s25
        %p246 = scmp.lt.s32.totalorder %s24, 1
        %s247 = scalar_select %p246, %s24, 1
        %p248 = scmp.lt.s32.totalorder %s25, 0
        %s249 = scalar_select %p248, %s25, 0
        %s250 = sadd.s32 %s249, %s247
        %s251 = scalar_lea.vmem %s1, %s250
        %p252 = scmp.lt.s32.totalorder %s24, 1
        %s253 = scalar_select %p252, %s24, 1
        %p254 = scmp.lt.s32.totalorder %s25, 0
        %s255 = scalar_select %p254, %s25, 0
        %s256 = sadd.s32 %s255, %s253
        %s257 = scalar_lea.vmem %s2, %s256
        %s258 = smul.u32 2, %s25
        %v259 = vld [vmem:[%s210] sm:$0xff]
        %v260 = vld [vmem:[%s210 + $0x8] sm:$0xff]
        %v261 = vld [vmem:[%s251] sm:$0x1]
        %v262 = vld [vmem:[%s257] sm:$0x1]
        %vm265 = vcmask 1040384
        %v266 = vrot.slane %v259, 7
        %v267 = vrot.slane %v260, 7
        %v268 = vsel %vm265, %v266, %v267
        %v273 = vlaneseq
        %v274 = vshrl.u32 %v273, 7
        %v275 = vsub.s32 0, %v274
        %v276 = vrot.slane %v262, %v275
        %v278 = vsel %vm265, %v261, %v266
        %v279 = vsel %vm265, %v267, %v276
        %v280 = vadd.f32 %v259, %v259
        %v281 = vadd.f32 %v260, %v260
        %v282 = vadd.f32 %v278, %v280
        %v283 = vadd.f32 %v268, %v281
        %vm286 = vcmask 1045504
        %v287 = vrot.slane %v278, 2
        %v288 = vrot.slane %v268, 2
        %v289 = vsel %vm286, %v287, %v288
        %v290 = vrot.slane %v279, 2
        %v291 = vsel %vm286, %v288, %v290
        %v294 = vadd.f32 %v282, %v289
        %v295 = vadd.f32 %v283, %v291
        %vm296 = vcmask 1041408
        %v297 = vrot.slane %v278, 6
        %v298 = vrot.slane %v268, 6
        %v299 = vsel %vm296, %v297, %v298
        %v303 = vsub.f32 %v278, %v297
        %v304 = vsub.f32 %v268, %v299
        %v305 = vsub.f32 %v279, %v298
        %308 = vrot.lane.b32.xlu0 %v294, 1
        %v309 = vpop.permute.xlu0 %308
        %310 = vrot.lane.b32.xlu0 %v295, 1
        %v311 = vpop.permute.xlu0 %310
        %vm314 = vcmask 7168
        %v315 = vsel %vm314, 0.0, %v309
        %v316 = vsel %vm314, 0.0, %v311
        %vm317 = vcmask 138240
        %v318 = vsel %vm317, %v315, 0.0
        %v319 = vsel %vm317, %v316, 0.0
        %v323 = vrot.slane %v303, 2
        %v324 = vrot.slane %v304, 2
        %v325 = vsel %vm286, %v323, %v324
        %v326 = vrot.slane %v305, 2
        %v327 = vsel %vm286, %v324, %v326
        %328 = vrot.lane.b32.xlu0 %v325, 1
        %v329 = vpop.permute.xlu0 %328
        %330 = vrot.lane.b32.xlu0 %v327, 1
        %v331 = vpop.permute.xlu0 %330
        %v334 = vsel %vm314, 0.0, %v329
        %v335 = vsel %vm314, 0.0, %v331
        %v336 = vsel %vm317, %v334, 0.0
        %v337 = vsel %vm317, %v335, 0.0
        %340 = vrot.lane.b32.xlu0 %v318, 2
        %v341 = vpop.permute.xlu0 %340
        %342 = vrot.lane.b32.xlu0 %v319, 2
        %v343 = vpop.permute.xlu0 %342
        %v346 = vsub.f32 %v318, %v341
        %v347 = vsub.f32 %v319, %v343
        %v348 = vadd.f32 %v303, %v303
        %v349 = vadd.f32 %v304, %v304
        %v350 = vadd.f32 %v305, %v305
        %v354 = vrot.slane %v348, 2
        %v355 = vrot.slane %v349, 2
        %v356 = vsel %vm286, %v354, %v355
        %v357 = vrot.slane %v350, 2
        %v358 = vsel %vm286, %v355, %v357
        %v361 = vadd.f32 %v336, %v356
        %v362 = vadd.f32 %v337, %v358
        %365 = vrot.lane.b32.xlu0 %v336, 126
        %v366 = vpop.permute.xlu0 %365
        %367 = vrot.lane.b32.xlu0 %v337, 126
        %v368 = vpop.permute.xlu0 %367
        %v371 = vadd.f32 %v361, %v366
        %v372 = vadd.f32 %v362, %v368
        %375 = vrot.lane.b32.xlu0 %v346, 126
        %v376 = vpop.permute.xlu0 %375
        %377 = vrot.lane.b32.xlu0 %v347, 126
        %v378 = vpop.permute.xlu0 %377
        %vm381 = vcmask 130048
        %382 = vst.msk [vmem:[%s244] sm:$0xff] %vm381, %v376
        %383 = vst.msk [vmem:[%s244 + $0x8] sm:$0xff] %vm381, %v378
        %s384 = scalar_lea.vmem %s244, 16 [#allocation5]
        %385 = vst.msk [vmem:[%s384] sm:$0xff] %vm381, %v371
        %386 = vst.msk [vmem:[%s384 + $0x8] sm:$0xff] %vm381, %v372
        %s387 = sand.u32 %s126, 1
        %s388 = scalar_lea.sflag [#allocation4], %s387
        %s389 = sand.u32 %s126, 1
        %s390 = smul.addr %s389, 32
        %s391 = scalar_lea.vmem [#allocation5], %s390
        // Predicated region
        $region37: #{tpu_custom_call.1} parent=31 // pred_check
          %p392 = pneg %p136
        $region38: #{tpu_custom_call.1} parent=31 // pred_check_branch
          %394 = sbr.rel (%p392) target = $region40
        $region39: #{tpu_custom_call.1} parent=31 // pred_region
          %s395 = smul.u32 2, %s25
          %s397 = ssub.s32 512, 512
          %398 = vsyncadd %s388, %s397
          %s399 = smul.addr %s24, 4
          %s400 = sadd.s32 %s395, %s399
          %s401 = smul.addr %s400, 128
          %s402 = scalar_lea.hbm %s3, %s401
          %s403 = sshll.u32 %s391, 4
          %s404 = int_to_ptr.vmem [resolvable:$true] %s403
          %409 = dma.vmem_to_hbm [thread:$0]  %s404, 512, %s402, %s388, 128, 128, 8
        $region40: #{tpu_custom_call.1} parent=31 // pred_fallthru
          _
      $region32: #{tpu_custom_call.1} parent=5 // pred_fallthru
        _
      %p410 = scmp.le.s32.totalorder 2, %s15
      // Predicated region
      $region41: #{tpu_custom_call.1} parent=5 // pred_check
        %p411 = pneg %p410
      $region42: #{tpu_custom_call.1} parent=5 // pred_check_branch
        %413 = sbr.rel (%p411) target = $region44
      $region43: #{tpu_custom_call.1} parent=5 // pred_region
        %s414 = ssub.s32 %s15, 2
        // Predicated region
        $region45: #{tpu_custom_call.1} parent=43 // pred_check
          %p415 = pneg %p142
        $region46: #{tpu_custom_call.1} parent=43 // pred_check_branch
          %417 = sbr.rel (%p415) target = $region48
        $region47: #{tpu_custom_call.1} parent=43 // pred_region
          %s418 = sand.u32 %s127, 1
          %s419 = scalar_lea.sflag [#allocation4], %s418
          %s420 = sand.u32 %s127, 1
          %s421 = smul.addr %s420, 32
          %s422 = scalar_lea.vmem [#allocation5], %s421
          %423 = dma.done %s419, 512
        $region48: #{tpu_custom_call.1} parent=43 // pred_fallthru
          _
      $region44: #{tpu_custom_call.1} parent=5 // pred_fallthru
        _
    $region6: #{tpu_custom_call.1} parent=1 // loop_footer
      %s19 = sadd.s32 1, %s15
    $region7: #{tpu_custom_call.1} parent=1 // loop_footer_branch
      %14 = sbr.rel target = $region3
    $region8: #{tpu_custom_call.1} parent=1 // loop_exit
      _
    %424 = vsyncpa [#allocation3], 1
    %s425 = scalar_lea.sflag [#allocation3], 1
    %426 = vsyncpa %s425, 1
    %427 = vsyncpa [#allocation4], 1
    %s428 = scalar_lea.sflag [#allocation4], 1
    %429 = vsyncpa %s428, 1

</llo_original>
